<compile_context>
chip_gen: v6e
topology: v6e:2x2x1
jax: 0.10.0
libtpu: 0.0.40
codegen_flags: <defaults>
</compile_context>

<pallas_src>
import math

import jax
import jax.numpy as jnp
from jax.experimental import pallas as pl
from jax.experimental.pallas import tpu as pltpu


def _num_tensorcores():
    """TensorCores addressed by one Pallas grid on this backend.

    v4 / v5p / v7x expose 2 TensorCores per JAX device (megacore); v5e / v6e
    (and older per-core devices) expose 1.  Pure perf heuristic -- a wrong
    answer only changes the grid-step count, never correctness.
    """
    try:
        kind = jax.devices()[0].device_kind.lower()
    except Exception:
        return 1
    if "lite" in kind or "v5e" in kind or "v6" in kind:
        return 1
    if "v7" in kind or "v5p" in kind or "v5 p" in kind or "v4" in kind:
        return 2
    return 1


def _make_atten_c_kernel(block_b, V, S, D, Dp):
    def kernel(q_ref, k_ref, v_ref, wqkv_ref, bqkv_ref, wo_ref, bo_ref, o_ref):
        # Blocks: q (block_b, V, D); k/v (block_b, S, D); weights are
        # replicated constants (same block every grid step).
        q = q_ref[...]
        k = k_ref[...]
        v = v_ref[...]

        wq_t = wqkv_ref[0]     # (D, Dp), softmax scale already folded in
        wkv_t = wqkv_ref[1]    # (D, Dp)
        bq = bqkv_ref[0]       # (1, Dp), scale folded in
        bkv = bqkv_ref[1]      # (1, Dp)
        wo_t = wo_ref[...]     # (Dp, D)
        bo = bo_ref[...]       # (1, D)

        # ---- projections (leading-dim reshapes only; no relayout) ----------
        q2 = q.reshape(block_b * V, D)
        k2 = k.reshape(block_b * S, D)
        v2 = v.reshape(block_b * S, D)

        qp = jnp.dot(q2, wq_t, preferred_element_type=jnp.float32) + bq
        kp = jnp.dot(k2, wkv_t, preferred_element_type=jnp.float32) + bkv
        vp = jnp.dot(v2, wkv_t, preferred_element_type=jnp.float32) + bkv

        qp = qp.reshape(block_b, V, Dp)
        kp = kp.reshape(block_b, S, Dp)
        vp = vp.reshape(block_b, S, Dp)

        # ---- attention (batched over block_b); scale already in qp ---------
        scores = jnp.einsum("bvd,bsd->bvs", qp, kp,
                            preferred_element_type=jnp.float32)
        m = jnp.max(scores, axis=-1, keepdims=True)
        p = jnp.exp(scores - m)
        denom = jnp.sum(p, axis=-1, keepdims=True)
        attn = p / denom                      # exact softmax normalisation

        out = jnp.einsum("bvs,bsd->bvd", attn, vp,
                         preferred_element_type=jnp.float32)

        # ---- output projection (contraction over padded Dp, output dim D) --
        res = jnp.dot(out.reshape(block_b * V, Dp), wo_t,
                      preferred_element_type=jnp.float32) + bo
        o_ref[...] = res.reshape(block_b, V, D).astype(o_ref.dtype)

    return kernel


def atten_c_forward(queries, keys, values, params):
    """queries: (B, V, D); keys/values: (B, S, D). Returns (B, V, D)."""
    B, V, D = queries.shape
    _, S, _ = keys.shape
    scale = 1.0 / math.sqrt(D)   # model D, as in the PyTorch module

    # ---- weight prep (once, on tiny constants; all exact) -------------------
    Dp = max(128, ((D + 127) // 128) * 128)
    pad = Dp - D

    wq_t = params["wq"].T * scale            # fold softmax scale into q-proj
    wkv_t = params["wkv"].T
    wo_t = params["wo"].T
    bq = params["bq"] * scale
    bkv = params["bkv"]
    bo = params["bo"].reshape(1, D)

    if pad:
        # Output-pad the input projections, contraction-pad the output
        # projection; activations stay unpadded (zero padding is exact).
        wq_t = jnp.pad(wq_t, ((0, 0), (0, pad)))    # (D, Dp)
        wkv_t = jnp.pad(wkv_t, ((0, 0), (0, pad)))  # (D, Dp)
        bq = jnp.pad(bq, (0, pad))                  # (Dp,)
        bkv = jnp.pad(bkv, (0, pad))                # (Dp,)
        wo_t = jnp.pad(wo_t, ((0, pad), (0, 0)))    # (Dp, D)

    wqkv = jnp.stack([wq_t, wkv_t], axis=0)               # (2, D, Dp)
    bqkv = jnp.stack([bq, bkv], axis=0).reshape(2, 1, Dp)  # (2, 1, Dp)

    # ---- generation-aware grid ----------------------------------------------
    # 1 step on single-TC chips; num_cores (=2) steps on megacore chips.
    num_steps = max(1, min(_num_tensorcores(), B))
    block_b = pl.cdiv(B, num_steps)
    Bp = block_b * num_steps
    if Bp != B:
        # Rare (odd B on a megacore chip): zero-pad the batch so the grid
        # stays at num_steps; padded rows are sliced off below.
        queries = jnp.pad(queries, ((0, Bp - B), (0, 0), (0, 0)))
        keys = jnp.pad(keys, ((0, Bp - B), (0, 0), (0, 0)))
        values = jnp.pad(values, ((0, Bp - B), (0, 0), (0, 0)))

    kernel = _make_atten_c_kernel(block_b, V, S, D, Dp)

    grid_spec = pltpu.PrefetchScalarGridSpec(
        num_scalar_prefetch=0,
        grid=(num_steps,),
        in_specs=[
            pl.BlockSpec((block_b, V, D), lambda b: (b, 0, 0)),   # queries
            pl.BlockSpec((block_b, S, D), lambda b: (b, 0, 0)),   # keys
            pl.BlockSpec((block_b, S, D), lambda b: (b, 0, 0)),   # values
            pl.BlockSpec((2, D, Dp), lambda b: (0, 0, 0)),        # Wq^T | Wkv^T
            pl.BlockSpec((2, 1, Dp), lambda b: (0, 0, 0)),        # bq | bkv
            pl.BlockSpec((Dp, D), lambda b: (0, 0)),              # Wo^T
            pl.BlockSpec((1, D), lambda b: (0, 0)),               # bo
        ],
        out_specs=pl.BlockSpec((block_b, V, D), lambda b: (b, 0, 0)),
    )

    out = pl.pallas_call(
        kernel,
        out_shape=jax.ShapeDtypeStruct((Bp, V, D), queries.dtype),
        grid_spec=grid_spec,
        compiler_params=pltpu.CompilerParams(
            dimension_semantics=("parallel",)),
    )(queries, keys, values, wqkv, bqkv, wo_t, bo)

    return out[:B] if Bp != B else out


def atten_c_reference(queries, keys, values, params):
    """Pure-JAX reference mirroring the PyTorch forward (dropout = identity)."""
    B, V, D = queries.shape
    scale = 1.0 / math.sqrt(D)
    q = queries @ params["wq"].T + params["bq"]
    k = keys @ params["wkv"].T + params["bkv"]
    v = values @ params["wkv"].T + params["bkv"]
    scores = jnp.einsum("bvd,bsd->bvs", q, k)
    attn = jax.nn.softmax(scale * scores, axis=-1)
    out = jnp.einsum("bvs,bsd->bvd", attn, v)
    return out @ params["wo"].T + params["bo"]


if __name__ == "__main__":
    B, V, S, D = 2, 8, 8, 32

    key = jax.random.PRNGKey(0)
    keys_split = jax.random.split(key, 9)

    bound = 1.0 / math.sqrt(D)  # nn.Linear default init range
    params = {
        "wq":  jax.random.uniform(keys_split[0], (D, D), jnp.float32, -bound, bound),
        "bq":  jax.random.uniform(keys_split[1], (D,),   jnp.float32, -bound, bound),
        "wkv": jax.random.uniform(keys_split[2], (D, D), jnp.float32, -bound, bound),
        "bkv": jax.random.uniform(keys_split[3], (D,),   jnp.float32, -bound, bound),
        "wo":  jax.random.uniform(keys_split[4], (D, D), jnp.float32, -bound, bound),
        "bo":  jax.random.uniform(keys_split[5], (D,),   jnp.float32, -bound, bound),
    }

    queries = jax.random.normal(keys_split[6], (B, V, D), jnp.float32)
    keys_in = jax.random.normal(keys_split[7], (B, S, D), jnp.float32)
    values_in = jax.random.normal(keys_split[8], (B, S, D), jnp.float32)

    out = atten_c_forward(queries, keys_in, values_in, params)
    out = jax.block_until_ready(out)

    ref = atten_c_reference(queries, keys_in, values_in, params)
    assert out.shape == (B, V, D)
    # Tolerance covers f32 MXU default precision + wrapper-side scale folding.
    assert jnp.allclose(out, ref, atol=2e-3, rtol=2e-3), "mismatch vs reference"

    print("KERNEL_OK")
</pallas_src>

<mosaic_0001>
module attributes {stable_mosaic.version = 11 : i64} {
  func.func @kernel(%arg0: i32, %arg1: memref<2x8x32xf32, #tpu.memory_space<vmem>>, %arg2: memref<2x8x32xf32, #tpu.memory_space<vmem>>, %arg3: memref<2x8x32xf32, #tpu.memory_space<vmem>>, %arg4: memref<2x32x128xf32, #tpu.memory_space<vmem>>, %arg5: memref<2x1x128xf32, #tpu.memory_space<vmem>>, %arg6: memref<128x32xf32, #tpu.memory_space<vmem>>, %arg7: memref<1x32xf32, #tpu.memory_space<vmem>>, %arg8: memref<2x8x32xf32, #tpu.memory_space<vmem>>) attributes {dimension_semantics = [#tpu.dimension_semantics<parallel>], iteration_bounds = array<i64: 1>, scalar_prefetch = 0 : i64, scratch_operands = 0 : i64, tpu.core_type = #tpu.core_type<tc>, window_params = [{transform_indices = @transform_0, window_bounds = array<i64: 2, 8, 32>}, {transform_indices = @transform_1, window_bounds = array<i64: 2, 8, 32>}, {transform_indices = @transform_2, window_bounds = array<i64: 2, 8, 32>}, {pipeline_mode = #tpu.pipeline_mode<synchronous>, transform_indices = @transform_3, window_bounds = array<i64: 2, 32, 128>}, {pipeline_mode = #tpu.pipeline_mode<synchronous>, transform_indices = @transform_4, window_bounds = array<i64: 2, 1, 128>}, {pipeline_mode = #tpu.pipeline_mode<synchronous>, transform_indices = @transform_5, window_bounds = array<i64: 128, 32>}, {pipeline_mode = #tpu.pipeline_mode<synchronous>, transform_indices = @transform_6, window_bounds = array<i64: 1, 32>}, {transform_indices = @transform_7, window_bounds = array<i64: 2, 8, 32>}]} {
    %c0 = arith.constant 0 : index
    %c0_0 = arith.constant 0 : index
    %c0_1 = arith.constant 0 : index
    %0 = vector.load %arg1[%c0, %c0_0, %c0_1] : memref<2x8x32xf32, #tpu.memory_space<vmem>>, vector<2x8x32xf32>
    %c0_2 = arith.constant 0 : index
    %c0_3 = arith.constant 0 : index
    %c0_4 = arith.constant 0 : index
    %1 = vector.load %arg2[%c0_2, %c0_3, %c0_4] : memref<2x8x32xf32, #tpu.memory_space<vmem>>, vector<2x8x32xf32>
    %c0_5 = arith.constant 0 : index
    %c0_6 = arith.constant 0 : index
    %c0_7 = arith.constant 0 : index
    %2 = vector.load %arg3[%c0_5, %c0_6, %c0_7] : memref<2x8x32xf32, #tpu.memory_space<vmem>>, vector<2x8x32xf32>
    %c0_8 = arith.constant 0 : index
    %c0_9 = arith.constant 0 : index
    %c0_10 = arith.constant 0 : index
    %3 = vector.load %arg4[%c0_8, %c0_9, %c0_10] : memref<2x32x128xf32, #tpu.memory_space<vmem>>, vector<1x32x128xf32>
    %4 = vector.shape_cast %3 : vector<1x32x128xf32> to vector<32x128xf32>
    %c1 = arith.constant 1 : index
    %c0_11 = arith.constant 0 : index
    %c0_12 = arith.constant 0 : index
    %5 = vector.load %arg4[%c1, %c0_11, %c0_12] : memref<2x32x128xf32, #tpu.memory_space<vmem>>, vector<1x32x128xf32>
    %6 = vector.shape_cast %5 : vector<1x32x128xf32> to vector<32x128xf32>
    %c0_13 = arith.constant 0 : index
    %c0_14 = arith.constant 0 : index
    %c0_15 = arith.constant 0 : index
    %7 = vector.load %arg5[%c0_13, %c0_14, %c0_15] : memref<2x1x128xf32, #tpu.memory_space<vmem>>, vector<1x1x128xf32>
    %8 = vector.shape_cast %7 : vector<1x1x128xf32> to vector<1x128xf32>
    %c1_16 = arith.constant 1 : index
    %c0_17 = arith.constant 0 : index
    %c0_18 = arith.constant 0 : index
    %9 = vector.load %arg5[%c1_16, %c0_17, %c0_18] : memref<2x1x128xf32, #tpu.memory_space<vmem>>, vector<1x1x128xf32>
    %10 = vector.shape_cast %9 : vector<1x1x128xf32> to vector<1x128xf32>
    %c0_19 = arith.constant 0 : index
    %c0_20 = arith.constant 0 : index
    %11 = vector.load %arg6[%c0_19, %c0_20] : memref<128x32xf32, #tpu.memory_space<vmem>>, vector<128x32xf32>
    %c0_21 = arith.constant 0 : index
    %c0_22 = arith.constant 0 : index
    %12 = vector.load %arg7[%c0_21, %c0_22] : memref<1x32xf32, #tpu.memory_space<vmem>>, vector<1x32xf32>
    %13 = vector.shape_cast %0 : vector<2x8x32xf32> to vector<16x32xf32>
    %14 = vector.shape_cast %1 : vector<2x8x32xf32> to vector<16x32xf32>
    %15 = vector.shape_cast %2 : vector<2x8x32xf32> to vector<16x32xf32>
    %cst = arith.constant dense<0.000000e+00> : vector<16x128xf32>
    %16 = tpu.matmul %13, %4, %cst {dimension_numbers = #tpu.dot_dimension_numbers<[1], [0], [0], [1], [0, 0, 1, 1], [], []>} : vector<16x32xf32>, vector<32x128xf32>, vector<16x128xf32> -> vector<16x128xf32>
    %17 = vector.broadcast %8 : vector<1x128xf32> to vector<16x128xf32>
    %18 = arith.addf %16, %17 : vector<16x128xf32>
    %cst_23 = arith.constant dense<0.000000e+00> : vector<16x128xf32>
    %19 = tpu.matmul %14, %6, %cst_23 {dimension_numbers = #tpu.dot_dimension_numbers<[1], [0], [0], [1], [0, 0, 1, 1], [], []>} : vector<16x32xf32>, vector<32x128xf32>, vector<16x128xf32> -> vector<16x128xf32>
    %20 = vector.broadcast %10 : vector<1x128xf32> to vector<16x128xf32>
    %21 = arith.addf %19, %20 : vector<16x128xf32>
    %cst_24 = arith.constant dense<0.000000e+00> : vector<16x128xf32>
    %22 = tpu.matmul %15, %6, %cst_24 {dimension_numbers = #tpu.dot_dimension_numbers<[1], [0], [0], [1], [0, 0, 1, 1], [], []>} : vector<16x32xf32>, vector<32x128xf32>, vector<16x128xf32> -> vector<16x128xf32>
    %23 = vector.broadcast %10 : vector<1x128xf32> to vector<16x128xf32>
    %24 = arith.addf %22, %23 : vector<16x128xf32>
    %25 = vector.shape_cast %18 : vector<16x128xf32> to vector<2x8x128xf32>
    %26 = vector.shape_cast %21 : vector<16x128xf32> to vector<2x8x128xf32>
    %27 = vector.shape_cast %24 : vector<16x128xf32> to vector<2x8x128xf32>
    "tpu.trace_start"() <{level = 10 : i32, message = "bvd,bsd->bvs"}> : () -> ()
    %cst_25 = arith.constant dense<0.000000e+00> : vector<2x8x8xf32>
    %28 = tpu.matmul %25, %26, %cst_25 {dimension_numbers = #tpu.dot_dimension_numbers<[2], [2], [1], [1], [0, 0, 0, 1, 1, 1], [0], [0]>} : vector<2x8x128xf32>, vector<2x8x128xf32>, vector<2x8x8xf32> -> vector<2x8x8xf32>
    "tpu.trace_stop"() : () -> ()
    %cst_26 = arith.constant dense<0xFF800000> : vector<2x8xf32>
    %29 = vector.multi_reduction <maximumf>, %28, %cst_26 [2] : vector<2x8x8xf32> to vector<2x8xf32>
    %30 = vector.shape_cast %29 : vector<2x8xf32> to vector<2x8x1xf32>
    %31 = vector.broadcast %30 : vector<2x8x1xf32> to vector<2x8x8xf32>
    %32 = arith.subf %28, %31 : vector<2x8x8xf32>
    %33 = math.exp %32 : vector<2x8x8xf32>
    %cst_27 = arith.constant dense<0.000000e+00> : vector<2x8xf32>
    %34 = vector.multi_reduction <add>, %33, %cst_27 [2] : vector<2x8x8xf32> to vector<2x8xf32>
    %35 = vector.shape_cast %34 : vector<2x8xf32> to vector<2x8x1xf32>
    %36 = vector.broadcast %35 : vector<2x8x1xf32> to vector<2x8x8xf32>
    %37 = arith.divf %33, %36 : vector<2x8x8xf32>
    "tpu.trace_start"() <{level = 10 : i32, message = "bvs,bsd->bvd"}> : () -> ()
    %cst_28 = arith.constant dense<0.000000e+00> : vector<2x8x128xf32>
    %38 = tpu.matmul %37, %27, %cst_28 {dimension_numbers = #tpu.dot_dimension_numbers<[2], [1], [1], [2], [0, 0, 0, 1, 1, 2], [0], [0]>} : vector<2x8x8xf32>, vector<2x8x128xf32>, vector<2x8x128xf32> -> vector<2x8x128xf32>
    "tpu.trace_stop"() : () -> ()
    %39 = vector.shape_cast %38 : vector<2x8x128xf32> to vector<16x128xf32>
    %cst_29 = arith.constant dense<0.000000e+00> : vector<16x32xf32>
    %40 = tpu.matmul %39, %11, %cst_29 {dimension_numbers = #tpu.dot_dimension_numbers<[1], [0], [0], [1], [0, 0, 1, 1], [], []>} : vector<16x128xf32>, vector<128x32xf32>, vector<16x32xf32> -> vector<16x32xf32>
    %41 = vector.broadcast %12 : vector<1x32xf32> to vector<16x32xf32>
    %42 = arith.addf %40, %41 : vector<16x32xf32>
    %43 = vector.shape_cast %42 : vector<16x32xf32> to vector<2x8x32xf32>
    %c0_30 = arith.constant 0 : index
    %c0_31 = arith.constant 0 : index
    %c0_32 = arith.constant 0 : index
    %44 = vector.load %arg8[%c0_30, %c0_31, %c0_32] : memref<2x8x32xf32, #tpu.memory_space<vmem>>, vector<2x8x32xf32>
    tpu.vector_store %arg8[%c0_30, %c0_31, %c0_32], %43 {strides = array<i32>} : memref<2x8x32xf32, #tpu.memory_space<vmem>>, vector<2x8x32xf32>,
    return
  }
  func.func @transform_0(%arg0: i32) -> (i32, i32, i32) {
    %c0_i32 = arith.constant 0 : i32
    %c0_i32_0 = arith.constant 0 : i32
    %c0_i32_1 = arith.constant 0 : i32
    return %arg0, %c0_i32, %c0_i32_0 : i32, i32, i32
  }
  func.func @transform_1(%arg0: i32) -> (i32, i32, i32) {
    %c0_i32 = arith.constant 0 : i32
    %c0_i32_0 = arith.constant 0 : i32
    %c0_i32_1 = arith.constant 0 : i32
    return %arg0, %c0_i32, %c0_i32_0 : i32, i32, i32
  }
  func.func @transform_2(%arg0: i32) -> (i32, i32, i32) {
    %c0_i32 = arith.constant 0 : i32
    %c0_i32_0 = arith.constant 0 : i32
    %c0_i32_1 = arith.constant 0 : i32
    return %arg0, %c0_i32, %c0_i32_0 : i32, i32, i32
  }
  func.func @transform_3(%arg0: i32) -> (i32, i32, i32) {
    %c0_i32 = arith.constant 0 : i32
    %c0_i32_0 = arith.constant 0 : i32
    %c0_i32_1 = arith.constant 0 : i32
    %c0_i32_2 = arith.constant 0 : i32
    return %c0_i32, %c0_i32_0, %c0_i32_1 : i32, i32, i32
  }
  func.func @transform_4(%arg0: i32) -> (i32, i32, i32) {
    %c0_i32 = arith.constant 0 : i32
    %c0_i32_0 = arith.constant 0 : i32
    %c0_i32_1 = arith.constant 0 : i32
    %c0_i32_2 = arith.constant 0 : i32
    return %c0_i32, %c0_i32_0, %c0_i32_1 : i32, i32, i32
  }
  func.func @transform_5(%arg0: i32) -> (i32, i32) {
    %c0_i32 = arith.constant 0 : i32
    %c0_i32_0 = arith.constant 0 : i32
    %c0_i32_1 = arith.constant 0 : i32
    return %c0_i32, %c0_i32_0 : i32, i32
  }
  func.func @transform_6(%arg0: i32) -> (i32, i32) {
    %c0_i32 = arith.constant 0 : i32
    %c0_i32_0 = arith.constant 0 : i32
    %c0_i32_1 = arith.constant 0 : i32
    return %c0_i32, %c0_i32_0 : i32, i32
  }
  func.func @transform_7(%arg0: i32) -> (i32, i32, i32) {
    %c0_i32 = arith.constant 0 : i32
    %c0_i32_0 = arith.constant 0 : i32
    %c0_i32_1 = arith.constant 0 : i32
    return %arg0, %c0_i32, %c0_i32_0 : i32, i32, i32
  }
}

</mosaic_0001>

<llo_original>
// kernel: tpu_custom_call.1
$region0: #{tpu_custom_call.1}
  #allocation0 [shape = 'u32[]', space=smem, size = 0x4, offset = 0x4, fixed_abs, tag = 'smem constant byte address 0x4 - core index']
  #allocation1 [shape = 'u32[144,128]{1,0:T(1,128)}', space=vmem, size = 0x12000, scoped, tag = 'internal scratch']
  %s0 = inlined_call_operand.vmem [shape: f32[2,8,32], index: 0, kind: input, shape index: {}]
  %s1 = inlined_call_operand.vmem [shape: f32[2,8,32], index: 1, kind: input, shape index: {}]
  %s2 = inlined_call_operand.vmem [shape: f32[2,8,32], index: 2, kind: input, shape index: {}]
  %s3 = inlined_call_operand.vmem [shape: f32[2,32,128], index: 3, kind: input, shape index: {}]
  %s4 = inlined_call_operand.vmem [shape: f32[2,1,128], index: 4, kind: input, shape index: {}]
  %s5 = inlined_call_operand.vmem [shape: f32[128,32], index: 5, kind: input, shape index: {}]
  %s6 = inlined_call_operand.vmem [shape: f32[1,32], index: 6, kind: input, shape index: {}]
  %s7 = inlined_call_operand.hbm [shape: f32[2,8,32], index: 7, kind: output, shape index: {}]
  %s8 = sld [smem:[#allocation0]]
  $region38: #{tpu_custom_call.1} parent=0
    _
  %s10 = ssub.s32 1, %s8
  %s11 = scalar_select 0, %s10, %s8
  $region1: #{tpu_custom_call.1} parent=0
    #allocation2 [shape = 'u8[8192]{0}', space=vmem, size = 0x2000, scoped, tag = 'output window, operand 0, single buffered']
    #allocation3 [shape = 's32[1]{0}', space=sflag, size = 0x4, scoped, tag = 'scoped memory for tpu_custom_call.1']
    %12 = vsyncpa [#allocation3], 0
    // Predicated region
    $region2: #{tpu_custom_call.1} parent=1 // pred_check
      _
    $region3: #{tpu_custom_call.1} parent=1 // pred_check_branch
      %14 = sbr.rel (0) target = $region5
    $region4: #{tpu_custom_call.1} parent=1 // pred_region
      _
    $region5: #{tpu_custom_call.1} parent=1 // pred_fallthru
      _
    // Predicated region
    $region6: #{tpu_custom_call.1} parent=1 // pred_check
      _
    $region7: #{tpu_custom_call.1} parent=1 // pred_check_branch
      %16 = sbr.rel (0) target = $region9
    $region8: #{tpu_custom_call.1} parent=1 // pred_region
      _
    $region9: #{tpu_custom_call.1} parent=1 // pred_fallthru
      _
    // Predicated region
    $region10: #{tpu_custom_call.1} parent=1 // pred_check
      _
    $region11: #{tpu_custom_call.1} parent=1 // pred_check_branch
      %18 = sbr.rel (0) target = $region13
    $region12: #{tpu_custom_call.1} parent=1 // pred_region
      _
    $region13: #{tpu_custom_call.1} parent=1 // pred_fallthru
      _
    // Predicated region
    $region14: #{tpu_custom_call.1} parent=1 // pred_check
      _
    $region15: #{tpu_custom_call.1} parent=1 // pred_check_branch
      %20 = sbr.rel (0) target = $region17
    $region16: #{tpu_custom_call.1} parent=1 // pred_region
      _
    $region17: #{tpu_custom_call.1} parent=1 // pred_fallthru
      _
    // Predicated region
    $region18: #{tpu_custom_call.1} parent=1 // pred_check
      _
    $region19: #{tpu_custom_call.1} parent=1 // pred_check_branch
      %22 = sbr.rel (0) target = $region21
    $region20: #{tpu_custom_call.1} parent=1 // pred_region
      _
    $region21: #{tpu_custom_call.1} parent=1 // pred_fallthru
      _
    // Predicated region
    $region22: #{tpu_custom_call.1} parent=1 // pred_check
      _
    $region23: #{tpu_custom_call.1} parent=1 // pred_check_branch
      %24 = sbr.rel (0) target = $region25
    $region24: #{tpu_custom_call.1} parent=1 // pred_region
      _
    $region25: #{tpu_custom_call.1} parent=1 // pred_fallthru
      _
    // Predicated region
    $region26: #{tpu_custom_call.1} parent=1 // pred_check
      _
    $region27: #{tpu_custom_call.1} parent=1 // pred_check_branch
      %26 = sbr.rel (0) target = $region29
    $region28: #{tpu_custom_call.1} parent=1 // pred_region
      _
    $region29: #{tpu_custom_call.1} parent=1 // pred_fallthru
      _
    %v27 = vld [vmem:[%s0] sm:$0xff]
    %v28 = vld [vmem:[%s0 + $0x8] sm:$0xff]
    %v29 = vld [vmem:[%s1] sm:$0xff]
    %v30 = vld [vmem:[%s1 + $0x8] sm:$0xff]
    %v31 = vld [vmem:[%s2] sm:$0xff]
    %v32 = vld [vmem:[%s2 + $0x8] sm:$0xff]
    %v33 = vld [vmem:[%s3] sm:$0xff]
    %v34 = vld [vmem:[%s3 + $0x8] sm:$0xff]
    %v35 = vld [vmem:[%s3 + $0x10] sm:$0xff]
    %v36 = vld [vmem:[%s3 + $0x18] sm:$0xff]
    %s37 = scalar_lea.vmem %s3, 32
    %v38 = vld [vmem:[%s37] sm:$0xff]
    %v39 = vld [vmem:[%s37 + $0x8] sm:$0xff]
    %v40 = vld [vmem:[%s37 + $0x10] sm:$0xff]
    %v41 = vld [vmem:[%s37 + $0x18] sm:$0xff]
    %v42 = vld [vmem:[%s4] sm:$0x1]
    %s43 = scalar_lea.vmem %s4, 1
    %v44 = vld [vmem:[%s43] sm:$0x1]
    %v45 = vld [vmem:[%s5] sm:$0xff]
    %v46 = vld [vmem:[%s5 + $0x8] sm:$0xff]
    %v47 = vld [vmem:[%s5 + $0x10] sm:$0xff]
    %v48 = vld [vmem:[%s5 + $0x18] sm:$0xff]
    %v49 = vld [vmem:[%s5 + $0x20] sm:$0xff]
    %v50 = vld [vmem:[%s5 + $0x28] sm:$0xff]
    %v51 = vld [vmem:[%s5 + $0x30] sm:$0xff]
    %v52 = vld [vmem:[%s5 + $0x38] sm:$0xff]
    %v53 = vld [vmem:[%s5 + $0x40] sm:$0xff]
    %v54 = vld [vmem:[%s5 + $0x48] sm:$0xff]
    %v55 = vld [vmem:[%s5 + $0x50] sm:$0xff]
    %v56 = vld [vmem:[%s5 + $0x58] sm:$0xff]
    %v57 = vld [vmem:[%s5 + $0x60] sm:$0xff]
    %v58 = vld [vmem:[%s5 + $0x68] sm:$0xff]
    %v59 = vld [vmem:[%s5 + $0x70] sm:$0xff]
    %v60 = vld [vmem:[%s5 + $0x78] sm:$0xff]
    %v61 = vld [vmem:[%s6] sm:$0x1]
    %v63 = vlaneseq
    %v64 = vshrl.u32 %v63, 7
    %v65 = vsub.s32 0, %v64
    %v66 = vrot.slane %v42, %v65
    %vm68 = vcmask 261120
    %v70 = vsel %vm68, %v27, 0
    %v73 = vsel %vm68, %v28, 0
    %75 = vmatprep.subr.mxu0 0.0
    %76 = vmatpush1.msra.mxu0 0.0
    %77 = vmatprep.subr.mxu0 0.0
    %78 = vmatpush1.msra.mxu0 0.0
    %79 = vmatprep.subr.mxu0 0.0
    %80 = vmatpush1.msra.mxu0 0.0
    %81 = vmatprep.subr.mxu0 0.0
    %82 = vmatpush1.msra.mxu0 0.0
    %83 = vmatprep.subr.mxu0 0.0
    %84 = vmatpush1.msra.mxu0 0.0
    %85 = vmatprep.subr.mxu0 0.0
    %86 = vmatpush1.msra.mxu0 0.0
    %87 = vmatprep.subr.mxu0 0.0
    %88 = vmatpush1.msra.mxu0 0.0
    %89 = vmatprep.subr.mxu0 0.0
    %90 = vmatpush1.msra.mxu0 0.0
    %91 = vmatprep.subr.mxu0 0.0
    %92 = vmatpush1.msra.mxu0 0.0
    %93 = vmatprep.subr.mxu0 0.0
    %94 = vmatpush1.msra.mxu0 0.0
    %95 = vmatprep.subr.mxu0 0.0
    %96 = vmatpush1.msra.mxu0 0.0
    %97 = vmatprep.subr.mxu0 0.0
    %98 = vmatpush1.msra.mxu0 0.0
    %99 = vmatprep.subr.mxu0 0.0
    %100 = vmatpush1.msra.mxu0 %v36
    %101 = vmatprep.subr.mxu0 0.0
    %102 = vmatpush1.msra.mxu0 %v35
    %103 = vmatprep.subr.mxu0 0.0
    %104 = vmatpush1.msra.mxu0 %v34
    %105 = vmatprep.subr.mxu0 0.0
    %106 = vmatpush1.msra.mxu0 %v33
    %107 = vmatprep.subr.mxu0 0.0
    %108 = vmatpush2.msra.mxu0 0.0
    %109 = vmatprep.subr.mxu0 0.0
    %110 = vmatpush2.msra.mxu0 0.0
    %111 = vmatprep.subr.mxu0 0.0
    %112 = vmatpush2.msra.mxu0 0.0
    %113 = vmatprep.subr.mxu0 0.0
    %114 = vmatpush2.msra.mxu0 0.0
    %115 = vmatprep.subr.mxu0 0.0
    %116 = vmatpush2.msra.mxu0 0.0
    %117 = vmatprep.subr.mxu0 0.0
    %118 = vmatpush2.msra.mxu0 0.0
    %119 = vmatprep.subr.mxu0 0.0
    %120 = vmatpush2.msra.mxu0 0.0
    %121 = vmatprep.subr.mxu0 0.0
    %122 = vmatpush2.msra.mxu0 0.0
    %123 = vmatprep.subr.mxu0 0.0
    %124 = vmatpush2.msra.mxu0 0.0
    %125 = vmatprep.subr.mxu0 0.0
    %126 = vmatpush2.msra.mxu0 0.0
    %127 = vmatprep.subr.mxu0 0.0
    %128 = vmatpush2.msra.mxu0 0.0
    %129 = vmatprep.subr.mxu0 0.0
    %130 = vmatpush2.msra.mxu0 0.0
    %131 = vmatprep.subr.mxu0 0.0
    %132 = vmatpush2.msra.mxu0 0.0
    %133 = vmatprep.subr.mxu0 0.0
    %134 = vmatpush2.msra.mxu0 0.0
    %135 = vmatprep.subr.mxu0 0.0
    %136 = vmatpush2.msra.mxu0 0.0
    %137 = vmatprep.subr.mxu0 0.0
    %138 = vmatpush2.msra.mxu0 0.0
    %139 = vmatprep.mubr.f32.mxu0 0.0
    %140 = vmatmul.mubr.f32.gmra.mxu0 %v70
    %v141 = vpop.f32.mrf.mxu0
    %v142 = vadd.f32 %v66, %v141
    %v143 = vpop.f32.mrf.mxu0
    %144 = vmatprep.mubr.f32.mxu0 0.0
    %145 = vmatmul.mubr.f32.gmra.mxu0 %v73
    %v146 = vpop.f32.mrf.mxu0
    %v147 = vadd.f32 %v66, %v146
    %v148 = vpop.f32.mrf.mxu0
    %149 = vdwg.mxu0
    %v151 = vlaneseq
    %v152 = vshrl.u32 %v151, 7
    %v153 = vsub.s32 0, %v152
    %v154 = vrot.slane %v44, %v153
    %v157 = vsel %vm68, %v29, 0
    %v160 = vsel %vm68, %v30, 0
    %162 = vmatprep.subr.mxu0 0.0
    %163 = vmatpush1.msra.mxu0 0.0
    %164 = vmatprep.subr.mxu0 0.0
    %165 = vmatpush1.msra.mxu0 0.0
    %166 = vmatprep.subr.mxu0 0.0
    %167 = vmatpush1.msra.mxu0 0.0
    %168 = vmatprep.subr.mxu0 0.0
    %169 = vmatpush1.msra.mxu0 0.0
    %170 = vmatprep.subr.mxu0 0.0
    %171 = vmatpush1.msra.mxu0 0.0
    %172 = vmatprep.subr.mxu0 0.0
    %173 = vmatpush1.msra.mxu0 0.0
    %174 = vmatprep.subr.mxu0 0.0
    %175 = vmatpush1.msra.mxu0 0.0
    %176 = vmatprep.subr.mxu0 0.0
    %177 = vmatpush1.msra.mxu0 0.0
    %178 = vmatprep.subr.mxu0 0.0
    %179 = vmatpush1.msra.mxu0 0.0
    %180 = vmatprep.subr.mxu0 0.0
    %181 = vmatpush1.msra.mxu0 0.0
    %182 = vmatprep.subr.mxu0 0.0
    %183 = vmatpush1.msra.mxu0 0.0
    %184 = vmatprep.subr.mxu0 0.0
    %185 = vmatpush1.msra.mxu0 0.0
    %186 = vmatprep.subr.mxu0 0.0
    %187 = vmatpush1.msra.mxu0 %v41
    %188 = vmatprep.subr.mxu0 0.0
    %189 = vmatpush1.msra.mxu0 %v40
    %190 = vmatprep.subr.mxu0 0.0
    %191 = vmatpush1.msra.mxu0 %v39
    %192 = vmatprep.subr.mxu0 0.0
    %193 = vmatpush1.msra.mxu0 %v38
    %194 = vmatprep.subr.mxu0 0.0
    %195 = vmatpush2.msra.mxu0 0.0
    %196 = vmatprep.subr.mxu0 0.0
    %197 = vmatpush2.msra.mxu0 0.0
    %198 = vmatprep.subr.mxu0 0.0
    %199 = vmatpush2.msra.mxu0 0.0
    %200 = vmatprep.subr.mxu0 0.0
    %201 = vmatpush2.msra.mxu0 0.0
    %202 = vmatprep.subr.mxu0 0.0
    %203 = vmatpush2.msra.mxu0 0.0
    %204 = vmatprep.subr.mxu0 0.0
    %205 = vmatpush2.msra.mxu0 0.0
    %206 = vmatprep.subr.mxu0 0.0
    %207 = vmatpush2.msra.mxu0 0.0
    %208 = vmatprep.subr.mxu0 0.0
    %209 = vmatpush2.msra.mxu0 0.0
    %210 = vmatprep.subr.mxu0 0.0
    %211 = vmatpush2.msra.mxu0 0.0
    %212 = vmatprep.subr.mxu0 0.0
    %213 = vmatpush2.msra.mxu0 0.0
    %214 = vmatprep.subr.mxu0 0.0
    %215 = vmatpush2.msra.mxu0 0.0
    %216 = vmatprep.subr.mxu0 0.0
    %217 = vmatpush2.msra.mxu0 0.0
    %218 = vmatprep.subr.mxu0 0.0
    %219 = vmatpush2.msra.mxu0 0.0
    %220 = vmatprep.subr.mxu0 0.0
    %221 = vmatpush2.msra.mxu0 0.0
    %222 = vmatprep.subr.mxu0 0.0
    %223 = vmatpush2.msra.mxu0 0.0
    %224 = vmatprep.subr.mxu0 0.0
    %225 = vmatpush2.msra.mxu0 0.0
    %226 = vmatprep.mubr.f32.mxu0 0.0
    %227 = vmatmul.mubr.f32.gmra.mxu0 %v157
    %v228 = vpop.f32.mrf.mxu0
    %v229 = vadd.f32 %v154, %v228
    %v230 = vpop.f32.mrf.mxu0
    %231 = vmatprep.mubr.f32.mxu0 0.0
    %232 = vmatmul.mubr.f32.gmra.mxu0 %v160
    %v233 = vpop.f32.mrf.mxu0
    %v234 = vadd.f32 %v154, %v233
    %v235 = vpop.f32.mrf.mxu0
    %236 = vdwg.mxu0
    %v238 = vsel %vm68, %v31, 0
    %v241 = vsel %vm68, %v32, 0
    %243 = vmatprep.subr.mxu0 0.0
    %244 = vmatpush1.msra.mxu0 0.0
    %245 = vmatprep.subr.mxu0 0.0
    %246 = vmatpush1.msra.mxu0 0.0
    %247 = vmatprep.subr.mxu0 0.0
    %248 = vmatpush1.msra.mxu0 0.0
    %249 = vmatprep.subr.mxu0 0.0
    %250 = vmatpush1.msra.mxu0 0.0
    %251 = vmatprep.subr.mxu0 0.0
    %252 = vmatpush1.msra.mxu0 0.0
    %253 = vmatprep.subr.mxu0 0.0
    %254 = vmatpush1.msra.mxu0 0.0
    %255 = vmatprep.subr.mxu0 0.0
    %256 = vmatpush1.msra.mxu0 0.0
    %257 = vmatprep.subr.mxu0 0.0
    %258 = vmatpush1.msra.mxu0 0.0
    %259 = vmatprep.subr.mxu0 0.0
    %260 = vmatpush1.msra.mxu0 0.0
    %261 = vmatprep.subr.mxu0 0.0
    %262 = vmatpush1.msra.mxu0 0.0
    %263 = vmatprep.subr.mxu0 0.0
    %264 = vmatpush1.msra.mxu0 0.0
    %265 = vmatprep.subr.mxu0 0.0
    %266 = vmatpush1.msra.mxu0 0.0
    %267 = vmatprep.subr.mxu0 0.0
    %268 = vmatpush1.msra.mxu0 %v41
    %269 = vmatprep.subr.mxu0 0.0
    %270 = vmatpush1.msra.mxu0 %v40
    %271 = vmatprep.subr.mxu0 0.0
    %272 = vmatpush1.msra.mxu0 %v39
    %273 = vmatprep.subr.mxu0 0.0
    %274 = vmatpush1.msra.mxu0 %v38
    %275 = vmatprep.subr.mxu0 0.0
    %276 = vmatpush2.msra.mxu0 0.0
    %277 = vmatprep.subr.mxu0 0.0
    %278 = vmatpush2.msra.mxu0 0.0
    %279 = vmatprep.subr.mxu0 0.0
    %280 = vmatpush2.msra.mxu0 0.0
    %281 = vmatprep.subr.mxu0 0.0
    %282 = vmatpush2.msra.mxu0 0.0
    %283 = vmatprep.subr.mxu0 0.0
    %284 = vmatpush2.msra.mxu0 0.0
    %285 = vmatprep.subr.mxu0 0.0
    %286 = vmatpush2.msra.mxu0 0.0
    %287 = vmatprep.subr.mxu0 0.0
    %288 = vmatpush2.msra.mxu0 0.0
    %289 = vmatprep.subr.mxu0 0.0
    %290 = vmatpush2.msra.mxu0 0.0
    %291 = vmatprep.subr.mxu0 0.0
    %292 = vmatpush2.msra.mxu0 0.0
    %293 = vmatprep.subr.mxu0 0.0
    %294 = vmatpush2.msra.mxu0 0.0
    %295 = vmatprep.subr.mxu0 0.0
    %296 = vmatpush2.msra.mxu0 0.0
    %297 = vmatprep.subr.mxu0 0.0
    %298 = vmatpush2.msra.mxu0 0.0
    %299 = vmatprep.subr.mxu0 0.0
    %300 = vmatpush2.msra.mxu0 0.0
    %301 = vmatprep.subr.mxu0 0.0
    %302 = vmatpush2.msra.mxu0 0.0
    %303 = vmatprep.subr.mxu0 0.0
    %304 = vmatpush2.msra.mxu0 0.0
    %305 = vmatprep.subr.mxu0 0.0
    %306 = vmatpush2.msra.mxu0 0.0
    %307 = vmatprep.mubr.f32.mxu0 0.0
    %308 = vmatmul.mubr.f32.gmra.mxu0 %v238
    %v309 = vpop.f32.mrf.mxu0
    %v310 = vadd.f32 %v154, %v309
    %v311 = vpop.f32.mrf.mxu0
    %312 = vmatprep.mubr.f32.mxu0 0.0
    %313 = vmatmul.mubr.f32.gmra.mxu0 %v241
    %v314 = vpop.f32.mrf.mxu0
    %v315 = vadd.f32 %v154, %v314
    %v316 = vpop.f32.mrf.mxu0
    %317 = vdwg.mxu0
    %318 = vmatprep.subr.mxu0 0.0
    %319 = vmatpush1.xpose.msra.mxu0 0.0
    %320 = vmatprep.subr.mxu0 0.0
    %321 = vmatpush1.xpose.msra.mxu0 0.0
    %322 = vmatprep.subr.mxu0 0.0
    %323 = vmatpush1.xpose.msra.mxu0 0.0
    %324 = vmatprep.subr.mxu0 0.0
    %325 = vmatpush1.xpose.msra.mxu0 0.0
    %326 = vmatprep.subr.mxu0 0.0
    %327 = vmatpush1.xpose.msra.mxu0 0.0
    %328 = vmatprep.subr.mxu0 0.0
    %329 = vmatpush1.xpose.msra.mxu0 0.0
    %330 = vmatprep.subr.mxu0 0.0
    %331 = vmatpush1.xpose.msra.mxu0 0.0
    %332 = vmatprep.subr.mxu0 0.0
    %333 = vmatpush1.xpose.msra.mxu0 0.0
    %334 = vmatprep.subr.mxu0 0.0
    %335 = vmatpush1.xpose.msra.mxu0 0.0
    %336 = vmatprep.subr.mxu0 0.0
    %337 = vmatpush1.xpose.msra.mxu0 0.0
    %338 = vmatprep.subr.mxu0 0.0
    %339 = vmatpush1.xpose.msra.mxu0 0.0
    %340 = vmatprep.subr.mxu0 0.0
    %341 = vmatpush1.xpose.msra.mxu0 0.0
    %342 = vmatprep.subr.mxu0 0.0
    %343 = vmatpush1.xpose.msra.mxu0 0.0
    %344 = vmatprep.subr.mxu0 0.0
    %345 = vmatpush1.xpose.msra.mxu0 0.0
    %346 = vmatprep.subr.mxu0 0.0
    %347 = vmatpush1.xpose.msra.mxu0 0.0
    %348 = vmatprep.subr.mxu0 0.0
    %349 = vmatpush1.xpose.msra.mxu0 %v229
    %350 = vmatprep.subr.mxu0 0.0
    %351 = vmatpush2.xpose.msra.mxu0 0.0
    %352 = vmatprep.subr.mxu0 0.0
    %353 = vmatpush2.xpose.msra.mxu0 0.0
    %354 = vmatprep.subr.mxu0 0.0
    %355 = vmatpush2.xpose.msra.mxu0 0.0
    %356 = vmatprep.subr.mxu0 0.0
    %357 = vmatpush2.xpose.msra.mxu0 0.0
    %358 = vmatprep.subr.mxu0 0.0
    %359 = vmatpush2.xpose.msra.mxu0 0.0
    %360 = vmatprep.subr.mxu0 0.0
    %361 = vmatpush2.xpose.msra.mxu0 0.0
    %362 = vmatprep.subr.mxu0 0.0
    %363 = vmatpush2.xpose.msra.mxu0 0.0
    %364 = vmatprep.subr.mxu0 0.0
    %365 = vmatpush2.xpose.msra.mxu0 0.0
    %366 = vmatprep.subr.mxu0 0.0
    %367 = vmatpush2.xpose.msra.mxu0 0.0
    %368 = vmatprep.subr.mxu0 0.0
    %369 = vmatpush2.xpose.msra.mxu0 0.0
    %370 = vmatprep.subr.mxu0 0.0
    %371 = vmatpush2.xpose.msra.mxu0 0.0
    %372 = vmatprep.subr.mxu0 0.0
    %373 = vmatpush2.xpose.msra.mxu0 0.0
    %374 = vmatprep.subr.mxu0 0.0
    %375 = vmatpush2.xpose.msra.mxu0 0.0
    %376 = vmatprep.subr.mxu0 0.0
    %377 = vmatpush2.xpose.msra.mxu0 0.0
    %378 = vmatprep.subr.mxu0 0.0
    %379 = vmatpush2.xpose.msra.mxu0 0.0
    %380 = vmatprep.subr.mxu0 0.0
    %381 = vmatpush2.xpose.msra.mxu0 0.0
    %382 = vmatprep.mubr.f32.mxu0 0.0
    %383 = vmatmul.mubr.f32.gmra.mxu0 %v142
    %v384 = vpop.f32.mrf.mxu0
    %v385 = vadd.f32 0.0, %v384
    %v386 = vpop.f32.mrf.mxu0
    %387 = vdwg.mxu0
    %388 = vmatprep.subr.mxu0 0.0
    %389 = vmatpush1.xpose.msra.mxu0 0.0
    %390 = vmatprep.subr.mxu0 0.0
    %391 = vmatpush1.xpose.msra.mxu0 0.0
    %392 = vmatprep.subr.mxu0 0.0
    %393 = vmatpush1.xpose.msra.mxu0 0.0
    %394 = vmatprep.subr.mxu0 0.0
    %395 = vmatpush1.xpose.msra.mxu0 0.0
    %396 = vmatprep.subr.mxu0 0.0
    %397 = vmatpush1.xpose.msra.mxu0 0.0
    %398 = vmatprep.subr.mxu0 0.0
    %399 = vmatpush1.xpose.msra.mxu0 0.0
    %400 = vmatprep.subr.mxu0 0.0
    %401 = vmatpush1.xpose.msra.mxu0 0.0
    %402 = vmatprep.subr.mxu0 0.0
    %403 = vmatpush1.xpose.msra.mxu0 0.0
    %404 = vmatprep.subr.mxu0 0.0
    %405 = vmatpush1.xpose.msra.mxu0 0.0
    %406 = vmatprep.subr.mxu0 0.0
    %407 = vmatpush1.xpose.msra.mxu0 0.0
    %408 = vmatprep.subr.mxu0 0.0
    %409 = vmatpush1.xpose.msra.mxu0 0.0
    %410 = vmatprep.subr.mxu0 0.0
    %411 = vmatpush1.xpose.msra.mxu0 0.0
    %412 = vmatprep.subr.mxu0 0.0
    %413 = vmatpush1.xpose.msra.mxu0 0.0
    %414 = vmatprep.subr.mxu0 0.0
    %415 = vmatpush1.xpose.msra.mxu0 0.0
    %416 = vmatprep.subr.mxu0 0.0
    %417 = vmatpush1.xpose.msra.mxu0 0.0
    %418 = vmatprep.subr.mxu0 0.0
    %419 = vmatpush1.xpose.msra.mxu0 %v234
    %420 = vmatprep.subr.mxu0 0.0
    %421 = vmatpush2.xpose.msra.mxu0 0.0
    %422 = vmatprep.subr.mxu0 0.0
    %423 = vmatpush2.xpose.msra.mxu0 0.0
    %424 = vmatprep.subr.mxu0 0.0
    %425 = vmatpush2.xpose.msra.mxu0 0.0
    %426 = vmatprep.subr.mxu0 0.0
    %427 = vmatpush2.xpose.msra.mxu0 0.0
    %428 = vmatprep.subr.mxu0 0.0
    %429 = vmatpush2.xpose.msra.mxu0 0.0
    %430 = vmatprep.subr.mxu0 0.0
    %431 = vmatpush2.xpose.msra.mxu0 0.0
    %432 = vmatprep.subr.mxu0 0.0
    %433 = vmatpush2.xpose.msra.mxu0 0.0
    %434 = vmatprep.subr.mxu0 0.0
    %435 = vmatpush2.xpose.msra.mxu0 0.0
    %436 = vmatprep.subr.mxu0 0.0
    %437 = vmatpush2.xpose.msra.mxu0 0.0
    %438 = vmatprep.subr.mxu0 0.0
    %439 = vmatpush2.xpose.msra.mxu0 0.0
    %440 = vmatprep.subr.mxu0 0.0
    %441 = vmatpush2.xpose.msra.mxu0 0.0
    %442 = vmatprep.subr.mxu0 0.0
    %443 = vmatpush2.xpose.msra.mxu0 0.0
    %444 = vmatprep.subr.mxu0 0.0
    %445 = vmatpush2.xpose.msra.mxu0 0.0
    %446 = vmatprep.subr.mxu0 0.0
    %447 = vmatpush2.xpose.msra.mxu0 0.0
    %448 = vmatprep.subr.mxu0 0.0
    %449 = vmatpush2.xpose.msra.mxu0 0.0
    %450 = vmatprep.subr.mxu0 0.0
    %451 = vmatpush2.xpose.msra.mxu0 0.0
    %452 = vmatprep.mubr.f32.mxu0 0.0
    %453 = vmatmul.mubr.f32.gmra.mxu0 %v147
    %v454 = vpop.f32.mrf.mxu0
    %v455 = vadd.f32 0.0, %v454
    %v456 = vpop.f32.mrf.mxu0
    %457 = vdwg.mxu0
    %vm458 = vcmask 64512
    %v459 = vsel %vm458, %v385, -inf
    %460 = vmax.xlane.f32.xlu0 %v459
    %v461 = vpop.xlane.xlu0 %460
    %v462 = vsel %vm458, %v455, -inf
    %463 = vmax.xlane.f32.xlu0 %v462
    %v464 = vpop.xlane.xlu0 %463
    %v465 = vsub.f32 %v385, %v461
    %v466 = vsub.f32 %v455, %v464
    %v467 = vmul.f32 %v465, 1.442695
    %v468 = vpow.pop %v467
    %v469 = vmul.f32 %v466, 1.442695
    %v470 = vpow.pop %v469
    %v471 = vsel %vm458, %v468, 0.0
    %472 = vadd.xlane.f32.xlu0 %v471
    %v473 = vpop.xlane.xlu0 %472
    %v474 = vsel %vm458, %v470, 0.0
    %475 = vadd.xlane.f32.xlu0 %v474
    %v476 = vpop.xlane.xlu0 %475
    %v477 = vrcp.pop %v473
    %v478 = vmul.f32 %v468, %v477
    %v479 = vrcp.pop %v476
    %v480 = vmul.f32 %v470, %v479
    %v482 = vsel %vm458, %v478, 0
    %484 = vmatprep.subr.mxu0 0.0
    %485 = vmatpush1.msra.mxu0 0.0
    %486 = vmatprep.subr.mxu0 0.0
    %487 = vmatpush1.msra.mxu0 0.0
    %488 = vmatprep.subr.mxu0 0.0
    %489 = vmatpush1.msra.mxu0 0.0
    %490 = vmatprep.subr.mxu0 0.0
    %491 = vmatpush1.msra.mxu0 0.0
    %492 = vmatprep.subr.mxu0 0.0
    %493 = vmatpush1.msra.mxu0 0.0
    %494 = vmatprep.subr.mxu0 0.0
    %495 = vmatpush1.msra.mxu0 0.0
    %496 = vmatprep.subr.mxu0 0.0
    %497 = vmatpush1.msra.mxu0 0.0
    %498 = vmatprep.subr.mxu0 0.0
    %499 = vmatpush1.msra.mxu0 0.0
    %500 = vmatprep.subr.mxu0 0.0
    %501 = vmatpush1.msra.mxu0 0.0
    %502 = vmatprep.subr.mxu0 0.0
    %503 = vmatpush1.msra.mxu0 0.0
    %504 = vmatprep.subr.mxu0 0.0
    %505 = vmatpush1.msra.mxu0 0.0
    %506 = vmatprep.subr.mxu0 0.0
    %507 = vmatpush1.msra.mxu0 0.0
    %508 = vmatprep.subr.mxu0 0.0
    %509 = vmatpush1.msra.mxu0 0.0
    %510 = vmatprep.subr.mxu0 0.0
    %511 = vmatpush1.msra.mxu0 0.0
    %512 = vmatprep.subr.mxu0 0.0
    %513 = vmatpush1.msra.mxu0 0.0
    %514 = vmatprep.subr.mxu0 0.0
    %515 = vmatpush1.msra.mxu0 %v310
    %516 = vmatprep.subr.mxu0 0.0
    %517 = vmatpush2.msra.mxu0 0.0
    %518 = vmatprep.subr.mxu0 0.0
    %519 = vmatpush2.msra.mxu0 0.0
    %520 = vmatprep.subr.mxu0 0.0
    %521 = vmatpush2.msra.mxu0 0.0
    %522 = vmatprep.subr.mxu0 0.0
    %523 = vmatpush2.msra.mxu0 0.0
    %524 = vmatprep.subr.mxu0 0.0
    %525 = vmatpush2.msra.mxu0 0.0
    %526 = vmatprep.subr.mxu0 0.0
    %527 = vmatpush2.msra.mxu0 0.0
    %528 = vmatprep.subr.mxu0 0.0
    %529 = vmatpush2.msra.mxu0 0.0
    %530 = vmatprep.subr.mxu0 0.0
    %531 = vmatpush2.msra.mxu0 0.0
    %532 = vmatprep.subr.mxu0 0.0
    %533 = vmatpush2.msra.mxu0 0.0
    %534 = vmatprep.subr.mxu0 0.0
    %535 = vmatpush2.msra.mxu0 0.0
    %536 = vmatprep.subr.mxu0 0.0
    %537 = vmatpush2.msra.mxu0 0.0
    %538 = vmatprep.subr.mxu0 0.0
    %539 = vmatpush2.msra.mxu0 0.0
    %540 = vmatprep.subr.mxu0 0.0
    %541 = vmatpush2.msra.mxu0 0.0
    %542 = vmatprep.subr.mxu0 0.0
    %543 = vmatpush2.msra.mxu0 0.0
    %544 = vmatprep.subr.mxu0 0.0
    %545 = vmatpush2.msra.mxu0 0.0
    %546 = vmatprep.subr.mxu0 0.0
    %547 = vmatpush2.msra.mxu0 0.0
    %548 = vmatprep.mubr.f32.mxu0 0.0
    %549 = vmatmul.mubr.f32.gmra.mxu0 %v482
    %v550 = vpop.f32.mrf.mxu0
    %v551 = vadd.f32 0.0, %v550
    %v552 = vpop.f32.mrf.mxu0
    %553 = vdwg.mxu0
    %v555 = vsel %vm458, %v480, 0
    %557 = vmatprep.subr.mxu0 0.0
    %558 = vmatpush1.msra.mxu0 0.0
    %559 = vmatprep.subr.mxu0 0.0
    %560 = vmatpush1.msra.mxu0 0.0
    %561 = vmatprep.subr.mxu0 0.0
    %562 = vmatpush1.msra.mxu0 0.0
    %563 = vmatprep.subr.mxu0 0.0
    %564 = vmatpush1.msra.mxu0 0.0
    %565 = vmatprep.subr.mxu0 0.0
    %566 = vmatpush1.msra.mxu0 0.0
    %567 = vmatprep.subr.mxu0 0.0
    %568 = vmatpush1.msra.mxu0 0.0
    %569 = vmatprep.subr.mxu0 0.0
    %570 = vmatpush1.msra.mxu0 0.0
    %571 = vmatprep.subr.mxu0 0.0
    %572 = vmatpush1.msra.mxu0 0.0
    %573 = vmatprep.subr.mxu0 0.0
    %574 = vmatpush1.msra.mxu0 0.0
    %575 = vmatprep.subr.mxu0 0.0
    %576 = vmatpush1.msra.mxu0 0.0
    %577 = vmatprep.subr.mxu0 0.0
    %578 = vmatpush1.msra.mxu0 0.0
    %579 = vmatprep.subr.mxu0 0.0
    %580 = vmatpush1.msra.mxu0 0.0
    %581 = vmatprep.subr.mxu0 0.0
    %582 = vmatpush1.msra.mxu0 0.0
    %583 = vmatprep.subr.mxu0 0.0
    %584 = vmatpush1.msra.mxu0 0.0
    %585 = vmatprep.subr.mxu0 0.0
    %586 = vmatpush1.msra.mxu0 0.0
    %587 = vmatprep.subr.mxu0 0.0
    %588 = vmatpush1.msra.mxu0 %v315
    %589 = vmatprep.subr.mxu0 0.0
    %590 = vmatpush2.msra.mxu0 0.0
    %591 = vmatprep.subr.mxu0 0.0
    %592 = vmatpush2.msra.mxu0 0.0
    %593 = vmatprep.subr.mxu0 0.0
    %594 = vmatpush2.msra.mxu0 0.0
    %595 = vmatprep.subr.mxu0 0.0
    %596 = vmatpush2.msra.mxu0 0.0
    %597 = vmatprep.subr.mxu0 0.0
    %598 = vmatpush2.msra.mxu0 0.0
    %599 = vmatprep.subr.mxu0 0.0
    %600 = vmatpush2.msra.mxu0 0.0
    %601 = vmatprep.subr.mxu0 0.0
    %602 = vmatpush2.msra.mxu0 0.0
    %603 = vmatprep.subr.mxu0 0.0
    %604 = vmatpush2.msra.mxu0 0.0
    %605 = vmatprep.subr.mxu0 0.0
    %606 = vmatpush2.msra.mxu0 0.0
    %607 = vmatprep.subr.mxu0 0.0
    %608 = vmatpush2.msra.mxu0 0.0
    %609 = vmatprep.subr.mxu0 0.0
    %610 = vmatpush2.msra.mxu0 0.0
    %611 = vmatprep.subr.mxu0 0.0
    %612 = vmatpush2.msra.mxu0 0.0
    %613 = vmatprep.subr.mxu0 0.0
    %614 = vmatpush2.msra.mxu0 0.0
    %615 = vmatprep.subr.mxu0 0.0
    %616 = vmatpush2.msra.mxu0 0.0
    %617 = vmatprep.subr.mxu0 0.0
    %618 = vmatpush2.msra.mxu0 0.0
    %619 = vmatprep.subr.mxu0 0.0
    %620 = vmatpush2.msra.mxu0 0.0
    %621 = vmatprep.mubr.f32.mxu0 0.0
    %622 = vmatmul.mubr.f32.gmra.mxu0 %v555
    %v623 = vpop.f32.mrf.mxu0
    %v624 = vadd.f32 0.0, %v623
    %v625 = vpop.f32.mrf.mxu0
    %626 = vdwg.mxu0
    %v628 = vlaneseq
    %v629 = vshrl.u32 %v628, 7
    %v630 = vsub.s32 0, %v629
    %v631 = vrot.slane %v61, %v630
    %633 = vmatprep.subr.mxu0 0.0
    %634 = vmatpush1.msra.mxu0 %v60
    %635 = vmatprep.subr.mxu0 0.0
    %636 = vmatpush1.msra.mxu0 %v59
    %637 = vmatprep.subr.mxu0 0.0
    %638 = vmatpush1.msra.mxu0 %v58
    %639 = vmatprep.subr.mxu0 0.0
    %640 = vmatpush1.msra.mxu0 %v57
    %641 = vmatprep.subr.mxu0 0.0
    %642 = vmatpush1.msra.mxu0 %v56
    %643 = vmatprep.subr.mxu0 0.0
    %644 = vmatpush1.msra.mxu0 %v55
    %645 = vmatprep.subr.mxu0 0.0
    %646 = vmatpush1.msra.mxu0 %v54
    %647 = vmatprep.subr.mxu0 0.0
    %648 = vmatpush1.msra.mxu0 %v53
    %649 = vmatprep.subr.mxu0 0.0
    %650 = vmatpush1.msra.mxu0 %v52
    %651 = vmatprep.subr.mxu0 0.0
    %652 = vmatpush1.msra.mxu0 %v51
    %653 = vmatprep.subr.mxu0 0.0
    %654 = vmatpush1.msra.mxu0 %v50
    %655 = vmatprep.subr.mxu0 0.0
    %656 = vmatpush1.msra.mxu0 %v49
    %657 = vmatprep.subr.mxu0 0.0
    %658 = vmatpush1.msra.mxu0 %v48
    %659 = vmatprep.subr.mxu0 0.0
    %660 = vmatpush1.msra.mxu0 %v47
    %661 = vmatprep.subr.mxu0 0.0
    %662 = vmatpush1.msra.mxu0 %v46
    %663 = vmatprep.subr.mxu0 0.0
    %664 = vmatpush1.msra.mxu0 %v45
    %665 = vmatprep.subr.mxu0 0.0
    %666 = vmatpush2.msra.mxu0 0.0
    %667 = vmatprep.subr.mxu0 0.0
    %668 = vmatpush2.msra.mxu0 0.0
    %669 = vmatprep.subr.mxu0 0.0
    %670 = vmatpush2.msra.mxu0 0.0
    %671 = vmatprep.subr.mxu0 0.0
    %672 = vmatpush2.msra.mxu0 0.0
    %673 = vmatprep.subr.mxu0 0.0
    %674 = vmatpush2.msra.mxu0 0.0
    %675 = vmatprep.subr.mxu0 0.0
    %676 = vmatpush2.msra.mxu0 0.0
    %677 = vmatprep.subr.mxu0 0.0
    %678 = vmatpush2.msra.mxu0 0.0
    %679 = vmatprep.subr.mxu0 0.0
    %680 = vmatpush2.msra.mxu0 0.0
    %681 = vmatprep.subr.mxu0 0.0
    %682 = vmatpush2.msra.mxu0 0.0
    %683 = vmatprep.subr.mxu0 0.0
    %684 = vmatpush2.msra.mxu0 0.0
    %685 = vmatprep.subr.mxu0 0.0
    %686 = vmatpush2.msra.mxu0 0.0
    %687 = vmatprep.subr.mxu0 0.0
    %688 = vmatpush2.msra.mxu0 0.0
    %689 = vmatprep.subr.mxu0 0.0
    %690 = vmatpush2.msra.mxu0 0.0
    %691 = vmatprep.subr.mxu0 0.0
    %692 = vmatpush2.msra.mxu0 0.0
    %693 = vmatprep.subr.mxu0 0.0
    %694 = vmatpush2.msra.mxu0 0.0
    %695 = vmatprep.subr.mxu0 0.0
    %696 = vmatpush2.msra.mxu0 0.0
    %697 = vmatprep.mubr.f32.mxu0 0.0
    %698 = vmatmul.mubr.f32.gmra.mxu0 %v551
    %v699 = vpop.f32.mrf.mxu0
    %v700 = vadd.f32 %v631, %v699
    %v701 = vpop.f32.mrf.mxu0
    %702 = vmatprep.mubr.f32.mxu0 0.0
    %703 = vmatmul.mubr.f32.gmra.mxu0 %v624
    %v704 = vpop.f32.mrf.mxu0
    %v705 = vadd.f32 %v631, %v704
    %v706 = vpop.f32.mrf.mxu0
    %707 = vdwg.mxu0
    %708 = vst.msk [vmem:[#allocation2] sm:$0xff] %vm68, %v700
    %709 = vst.msk [vmem:[#allocation2 + $0x8] sm:$0xff] %vm68, %v705
    // Predicated region
    $region30: #{tpu_custom_call.1} parent=1 // pred_check
      _
    $region31: #{tpu_custom_call.1} parent=1 // pred_check_branch
      %711 = sbr.rel (0) target = $region33
    $region32: #{tpu_custom_call.1} parent=1 // pred_region
      %s713 = ssub.s32 256, 256
      %714 = vsyncadd [#allocation3], %s713
      %s715 = sshll.u32 [#allocation2], 4
      %s716 = int_to_ptr.vmem [resolvable:$true] %s715
      %721 = dma.vmem_to_hbm [thread:$0]  %s716, 256, %s7, [#allocation3], 128, 128, 8
    $region33: #{tpu_custom_call.1} parent=1 // pred_fallthru
      _
    // Predicated region
    $region34: #{tpu_custom_call.1} parent=1 // pred_check
      _
    $region35: #{tpu_custom_call.1} parent=1 // pred_check_branch
      %723 = sbr.rel (0) target = $region37
    $region36: #{tpu_custom_call.1} parent=1 // pred_region
      %724 = dma.done [#allocation3], 256
    $region37: #{tpu_custom_call.1} parent=1 // pred_fallthru
      _
    %725 = vsyncpa [#allocation3], 1

</llo_original>
